<compile_context>
chip_gen: v7x
topology: tpu7x:2x2x1
jax: 0.10.0
libtpu: 0.0.40
codegen_flags: <defaults>
</compile_context>

<pallas_src>
import jax
import jax.numpy as jnp
from jax.experimental import pallas as pl
from jax.experimental.pallas import tpu as pltpu

_MiB = 1024 * 1024


def _round_up(x, m):
    return ((x + m - 1) // m) * m


def _tpu_vmem_bytes():
    """Physical VMEM per core; conservative fallback if the query is unavailable."""
    try:
        return int(pltpu.get_tpu_info().vmem_capacity_bytes)
    except Exception:
        return 64 * _MiB  # v7x per-TensorCore size == safest assumption


def _make_tile_plan(n_in, n_out):
    """Generation-aware tile caps plus fixed (bn, bk, Kp, Np) for this layer."""
    vmem_cap = _tpu_vmem_bytes()
    if vmem_cap >= 100 * _MiB:
        # v5e / v6e: 128 MiB physical VMEM -> big tiles (halves weight re-reads).
        tm_cap, tn_cap, tk_cap = 1024, 512, 1024
    else:
        # v7x: 64 MiB per TensorCore -> keep double-buffered residency ~<= 12 MiB.
        tm_cap, tn_cap, tk_cap = 512, 512, 1024
    # MXU-facing dims: full (128-padded) problem dim when small, 256-aligned caps
    # when large (keeps the 256-wide v6e/v7x MXU fully fed).
    bn = min(tn_cap, _round_up(n_out, 128))
    bk = min(tk_cap, _round_up(n_in, 128))
    return dict(
        tm_cap=tm_cap,
        bn=bn,
        bk=bk,
        kp=_round_up(n_in, bk),
        np_=_round_up(n_out, bn),
        vmem_budget=int(vmem_cap * 3 // 4),
    )


def _pick_bm(batch, tm_cap):
    """M tile: minimal padding for small batches, 256-aligned minimal-waste otherwise."""
    b8 = _round_up(batch, 8)
    if b8 <= tm_cap:
        return b8  # single M block, <=7 padded rows
    best_bm, best_pad = tm_cap, _round_up(batch, tm_cap) - batch
    bm = tm_cap - 256
    while bm >= 256:
        pad = _round_up(batch, bm) - batch
        if pad < best_pad:
            best_bm, best_pad = bm, pad
        bm -= 256
    return best_bm


def _linear_kernel_f32_out(x_ref, wt_ref, b_ref, o_ref):
    """Accumulate partial products directly into the resident f32 output block."""
    k = pl.program_id(2)

    @pl.when(k == 0)
    def _init():
        o_ref[...] = jnp.zeros_like(o_ref)

    o_ref[...] += jnp.dot(x_ref[...], wt_ref[...],
                          preferred_element_type=jnp.float32)

    @pl.when(k == pl.num_programs(2) - 1)
    def _finalize():
        o_ref[...] += b_ref[...]  # bias added exactly once


def _linear_kernel_scratch(x_ref, wt_ref, b_ref, o_ref, acc_ref):
    """f32 scratch accumulator; only used when the output dtype is narrower than f32."""
    k = pl.program_id(2)

    @pl.when(k == 0)
    def _init():
        acc_ref[...] = jnp.zeros_like(acc_ref)

    acc_ref[...] += jnp.dot(x_ref[...], wt_ref[...],
                            preferred_element_type=jnp.float32)

    @pl.when(k == pl.num_programs(2) - 1)
    def _finalize():
        o_ref[...] = (acc_ref[...] + b_ref[...]).astype(o_ref.dtype)


def linear_forward(x, weight_t_p, bias_p, n_out, plan, *, operand_dtype=None):
    """x: (B, n_in). weight_t_p: (Kp, Np) pre-transposed & pre-padded. bias_p: (1, Np)."""
    B, n_in = x.shape
    Kp, Np = weight_t_p.shape
    out_dtype = x.dtype

    bk, bn = plan["bk"], plan["bn"]
    bm = _pick_bm(B, plan["tm_cap"])
    Mp = _round_up(B, bm)

    # v7x: if tile growth collapsed the M axis to one block, split the N axis so both
    # TensorCores still get parallel work (near-neutral on single-TC v5e/v6e since X
    # re-reads are cheap when the whole batch fits one M block).
    if Mp // bm == 1 and bn >= 512 and Np // (bn // 2) >= 2:
        bn = bn // 2

    # Only X is padded per call; weight/bias were padded once in __init__.
    xp = x
    if Mp != B or Kp != n_in:
        xp = jnp.pad(x, ((0, Mp - B), (0, Kp - n_in)))
    if operand_dtype is not None and xp.dtype != operand_dtype:
        xp = xp.astype(operand_dtype)

    grid = (Mp // bm, Np // bn, Kp // bk)
    n_blocks_m, n_blocks_n = grid[0], grid[1]

    in_item = jnp.dtype(xp.dtype).itemsize
    w_item = jnp.dtype(weight_t_p.dtype).itemsize

    # Resident VMEM (double-buffered inputs + output) -> scoped-VMEM limit.
    resident = (2 * bm * bk * in_item + 2 * bk * bn * w_item
                + 2 * bm * bn * 4 + 2 * bn * 4)
    vmem_limit = int(min(plan["vmem_budget"],
                         max(32 * _MiB, resident + 8 * _MiB)))

    # HBM traffic including tiled re-reads: X once per N pass, W once per M pass.
    cost = pl.CostEstimate(
        flops=2 * Mp * Kp * Np,
        transcendentals=0,
        bytes_accessed=(xp.size * in_item * n_blocks_n
                        + weight_t_p.size * w_item * n_blocks_m
                        + bias_p.size * 4 + Mp * Np * 4),
    )

    direct = jnp.dtype(out_dtype) == jnp.float32
    kernel = _linear_kernel_f32_out if direct else _linear_kernel_scratch
    scratch = [] if direct else [pltpu.VMEM((bm, bn), jnp.float32)]

    out = pl.pallas_call(
        kernel,
        out_shape=jax.ShapeDtypeStruct((Mp, Np), out_dtype),
        grid_spec=pltpu.PrefetchScalarGridSpec(
            num_scalar_prefetch=0,
            grid=grid,
            in_specs=[
                pl.BlockSpec((bm, bk), lambda i, j, k: (i, k)),   # X tile
                pl.BlockSpec((bk, bn), lambda i, j, k: (k, j)),   # W^T tile
                pl.BlockSpec((1, bn), lambda i, j, k: (0, j)),    # bias row (N only)
            ],
            out_specs=pl.BlockSpec((bm, bn), lambda i, j, k: (i, j)),
            scratch_shapes=scratch,
        ),
        compiler_params=pltpu.CompilerParams(
            dimension_semantics=("parallel", "parallel", "arbitrary"),
            vmem_limit_bytes=vmem_limit,
        ),
        cost_estimate=cost,
    )(xp, weight_t_p, bias_p)

    if Mp != B or Np != n_out:
        out = out[:B, :n_out]
    return out


class LinearRegressionPallas:
    """Mirrors torch LinearRegression(n_in, n_out).forward (a single nn.Linear)."""

    def __init__(self, n_in, n_out, key, *, use_bf16_operands=False):
        self.n_in, self.n_out = n_in, n_out
        kw, kb = jax.random.split(key)
        bound = 1.0 / (n_in ** 0.5)
        # Same U(-1/sqrt(n_in), 1/sqrt(n_in)) init as nn.Linear, but stored
        # pre-transposed as (n_in, n_out): no per-forward HBM transpose.
        self.weight_t = jax.random.uniform(
            kw, (n_in, n_out), jnp.float32, minval=-bound, maxval=bound)
        self.bias = jax.random.uniform(
            kb, (n_out,), jnp.float32, minval=-bound, maxval=bound)

        # Tile plan is fixed per layer; pad weight/bias ONCE here so the per-call
        # path never touches the weight just to pad it.
        self._operand_dtype = jnp.bfloat16 if use_bf16_operands else None
        self._plan = _make_tile_plan(n_in, n_out)
        Kp, Np = self._plan["kp"], self._plan["np_"]
        w = self.weight_t
        if (Kp, Np) != w.shape:
            w = jnp.pad(w, ((0, Kp - n_in), (0, Np - n_out)))
        if use_bf16_operands:
            w = w.astype(jnp.bfloat16)  # MXU-native operands; f32 accumulate/bias
        self._weight_t_p = w
        b = self.bias if Np == n_out else jnp.pad(self.bias, (0, Np - n_out))
        self._bias_p = b.reshape(1, Np).astype(jnp.float32)

    def __call__(self, x):
        return linear_forward(x, self._weight_t_p, self._bias_p, self.n_out,
                              self._plan, operand_dtype=self._operand_dtype)

    # TODO(synk): .fit() (Adam training loop) is host-side training logic, not a
    # forward-pass op — out of scope for a Pallas forward kernel.


if __name__ == "__main__":
    key = jax.random.PRNGKey(0)
    k_p1, k_x1, k_p2, k_x2, k_p3, k_x3 = jax.random.split(key, 6)

    # --- Small, module-consistent shape (pads up to one lane-dense tile). ---
    batch, n_in, n_out = 8, 32, 16
    model = LinearRegressionPallas(n_in, n_out, k_p1)
    x = jax.random.normal(k_x1, (batch, n_in), jnp.float32)
    out = jax.block_until_ready(model(x))
    ref = x @ model.weight_t + model.bias
    assert out.shape == (batch, n_out)
    assert jnp.allclose(out, ref, atol=1e-4, rtol=1e-4)

    # --- Larger shape that exercises the multi-block (M, N, K) tiled grid. ---
    B2, nin2, nout2 = 2048, 2048, 1024
    model2 = LinearRegressionPallas(nin2, nout2, k_p2)
    x2 = jax.random.normal(k_x2, (B2, nin2), jnp.float32)
    out2 = jax.block_until_ready(model2(x2))
    ref2 = (jnp.dot(x2, model2.weight_t, precision=jax.lax.Precision.HIGHEST)
            + model2.bias)
    assert out2.shape == (B2, nout2)
    assert jnp.allclose(out2, ref2, atol=2e-3, rtol=2e-3)

    # --- Optional bf16-operand path (f32 accumulate) with looser tolerance. ---
    model3 = LinearRegressionPallas(n_in, n_out, k_p3, use_bf16_operands=True)
    x3 = jax.random.normal(k_x3, (batch, n_in), jnp.float32)
    out3 = jax.block_until_ready(model3(x3))
    ref3 = x3 @ model3.weight_t + model3.bias
    assert out3.shape == (batch, n_out)
    assert jnp.allclose(out3, ref3, atol=5e-2, rtol=5e-2)

    print("KERNEL_OK")
</pallas_src>

<mosaic_0001>
module attributes {stable_mosaic.version = 11 : i64} {
  func.func @_linear_kernel_f32_out(%arg0: i32, %arg1: i32, %arg2: i32, %arg3: memref<8x128xf32, #tpu.memory_space<vmem>>, %arg4: memref<128x128xf32, #tpu.memory_space<vmem>>, %arg5: memref<1x128xf32, #tpu.memory_space<vmem>>, %arg6: memref<8x128xf32, #tpu.memory_space<vmem>>) attributes {dimension_semantics = [#tpu.dimension_semantics<parallel>, #tpu.dimension_semantics<parallel>, #tpu.dimension_semantics<arbitrary>], iteration_bounds = array<i64: 1, 1, 1>, scalar_prefetch = 0 : i64, scratch_operands = 0 : i64, tpu.core_type = #tpu.core_type<tc>, window_params = [{transform_indices = @transform_0, window_bounds = array<i64: 8, 128>}, {transform_indices = @transform_1, window_bounds = array<i64: 128, 128>}, {transform_indices = @transform_2, window_bounds = array<i64: 1, 128>}, {transform_indices = @transform_3, window_bounds = array<i64: 8, 128>}]} {
    %c0_i32 = arith.constant 0 : i32
    %0 = arith.cmpi eq, %arg2, %c0_i32 : i32
    %1 = arith.extui %0 : i1 to i32
    %c0_i32_0 = arith.constant 0 : i32
    %2 = arith.cmpi ne, %1, %c0_i32_0 : i32
    scf.if %2 {
      %cst_10 = arith.constant 0.000000e+00 : f32
      %12 = vector.broadcast %cst_10 : f32 to vector<8x128xf32>
      %c0_11 = arith.constant 0 : index
      %c0_12 = arith.constant 0 : index
      %13 = vector.load %arg6[%c0_11, %c0_12] : memref<8x128xf32, #tpu.memory_space<vmem>>, vector<8x128xf32>
      tpu.vector_store %arg6[%c0_11, %c0_12], %12 {strides = array<i32>} : memref<8x128xf32, #tpu.memory_space<vmem>>, vector<8x128xf32>,
    } else {
    }
    %c0 = arith.constant 0 : index
    %c0_1 = arith.constant 0 : index
    %3 = vector.load %arg6[%c0, %c0_1] : memref<8x128xf32, #tpu.memory_space<vmem>>, vector<8x128xf32>
    %c0_2 = arith.constant 0 : index
    %c0_3 = arith.constant 0 : index
    %4 = vector.load %arg3[%c0_2, %c0_3] : memref<8x128xf32, #tpu.memory_space<vmem>>, vector<8x128xf32>
    %c0_4 = arith.constant 0 : index
    %c0_5 = arith.constant 0 : index
    %5 = vector.load %arg4[%c0_4, %c0_5] : memref<128x128xf32, #tpu.memory_space<vmem>>, vector<128x128xf32>
    %cst = arith.constant dense<0.000000e+00> : vector<8x128xf32>
    %6 = tpu.matmul %4, %5, %cst {dimension_numbers = #tpu.dot_dimension_numbers<[1], [0], [0], [1], [0, 0, 1, 1], [], []>} : vector<8x128xf32>, vector<128x128xf32>, vector<8x128xf32> -> vector<8x128xf32>
    %7 = arith.addf %3, %6 : vector<8x128xf32>
    %c0_6 = arith.constant 0 : index
    %c0_7 = arith.constant 0 : index
    %8 = vector.load %arg6[%c0_6, %c0_7] : memref<8x128xf32, #tpu.memory_space<vmem>>, vector<8x128xf32>
    tpu.vector_store %arg6[%c0_6, %c0_7], %7 {strides = array<i32>} : memref<8x128xf32, #tpu.memory_space<vmem>>, vector<8x128xf32>,
    %c0_i32_8 = arith.constant 0 : i32
    %9 = arith.cmpi eq, %arg2, %c0_i32_8 : i32
    %10 = arith.extui %9 : i1 to i32
    %c0_i32_9 = arith.constant 0 : i32
    %11 = arith.cmpi ne, %10, %c0_i32_9 : i32
    scf.if %11 {
      %c0_10 = arith.constant 0 : index
      %c0_11 = arith.constant 0 : index
      %12 = vector.load %arg6[%c0_10, %c0_11] : memref<8x128xf32, #tpu.memory_space<vmem>>, vector<8x128xf32>
      %c0_12 = arith.constant 0 : index
      %c0_13 = arith.constant 0 : index
      %13 = vector.load %arg5[%c0_12, %c0_13] : memref<1x128xf32, #tpu.memory_space<vmem>>, vector<1x128xf32>
      %14 = vector.broadcast %13 : vector<1x128xf32> to vector<8x128xf32>
      %15 = arith.addf %12, %14 : vector<8x128xf32>
      %c0_14 = arith.constant 0 : index
      %c0_15 = arith.constant 0 : index
      %16 = vector.load %arg6[%c0_14, %c0_15] : memref<8x128xf32, #tpu.memory_space<vmem>>, vector<8x128xf32>
      tpu.vector_store %arg6[%c0_14, %c0_15], %15 {strides = array<i32>} : memref<8x128xf32, #tpu.memory_space<vmem>>, vector<8x128xf32>,
    } else {
    }
    return
  }
  func.func @transform_0(%arg0: i32, %arg1: i32, %arg2: i32) -> (i32, i32) {
    %c0_i32 = arith.constant 0 : i32
    return %arg0, %arg2 : i32, i32
  }
  func.func @transform_1(%arg0: i32, %arg1: i32, %arg2: i32) -> (i32, i32) {
    %c0_i32 = arith.constant 0 : i32
    return %arg2, %arg1 : i32, i32
  }
  func.func @transform_2(%arg0: i32, %arg1: i32, %arg2: i32) -> (i32, i32) {
    %c0_i32 = arith.constant 0 : i32
    %c0_i32_0 = arith.constant 0 : i32
    return %c0_i32, %arg1 : i32, i32
  }
  func.func @transform_3(%arg0: i32, %arg1: i32, %arg2: i32) -> (i32, i32) {
    %c0_i32 = arith.constant 0 : i32
    return %arg0, %arg1 : i32, i32
  }
}

</mosaic_0001>

<llo_original>
// kernel: tpu_custom_call.1
$region0: #{tpu_custom_call.1}
  #allocation0 [shape = 'u32[]', space=smem, size = 0x4, offset = 0x4, fixed_abs, tag = 'smem constant byte address 0x4 - core index']
  #allocation1 [shape = 'u32[144,128]{1,0:T(1,128)}', space=vmem, size = 0x12000, scoped, tag = 'internal scratch']
  %s0 = inlined_call_operand.hbm [shape: f32[8,128], index: 0, kind: input, shape index: {}]
  %s1 = inlined_call_operand.hbm [shape: f32[128,128], index: 1, kind: input, shape index: {}]
  %s2 = inlined_call_operand.vmem [shape: f32[1,128], index: 2, kind: input, shape index: {}]
  %s3 = inlined_call_operand.hbm [shape: f32[8,128], index: 3, kind: output, shape index: {}]
  %s4 = sld [smem:[#allocation0]]
  $region38: #{tpu_custom_call.1} parent=0
    _
  %s6 = ssub.s32 1, %s4
  %s7 = scalar_select 0, %s6, %s4
  $region1: #{tpu_custom_call.1} parent=0
    #allocation2 [shape = 'u8[4096]{0}', space=vmem, size = 0x1000, scoped, tag = 'input window, operand 0, single buffered']
    #allocation3 [shape = 's32[1]{0}', space=sflag, size = 0x4, scoped, tag = 'scoped memory for tpu_custom_call.1']
    #allocation4 [shape = 's32[1]{0}', space=sflag, size = 0x4, scoped, tag = 'scoped memory for tpu_custom_call.1']
    #allocation5 [shape = 'u8[65536]{0}', space=vmem, size = 0x10000, scoped, tag = 'input window, operand 1, single buffered']
    #allocation6 [shape = 's32[1]{0}', space=sflag, size = 0x4, scoped, tag = 'scoped memory for tpu_custom_call.1']
    #allocation7 [shape = 'u8[4096]{0}', space=vmem, size = 0x1000, scoped, tag = 'output window, operand 0, single buffered']
    %8 = vsyncpa [#allocation3], 0
    %9 = vsyncpa [#allocation6], 0
    %10 = vsyncpa [#allocation4], 0
    // Predicated region
    $region2: #{tpu_custom_call.1} parent=1 // pred_check
      _
    $region3: #{tpu_custom_call.1} parent=1 // pred_check_branch
      %12 = sbr.rel (0) target = $region5
    $region4: #{tpu_custom_call.1} parent=1 // pred_region
      %s14 = ssub.s32 128, 128
      %15 = vsyncadd [#allocation3], %s14
      %s17 = sshll.u32 [#allocation2], 4
      %s18 = int_to_ptr.vmem [resolvable:$true] %s17
      %20 = dma.hbm_to_vmem [thread:$0]  %s0, 128, %s18, [#allocation3]
    $region5: #{tpu_custom_call.1} parent=1 // pred_fallthru
      _
    // Predicated region
    $region6: #{tpu_custom_call.1} parent=1 // pred_check
      _
    $region7: #{tpu_custom_call.1} parent=1 // pred_check_branch
      %22 = sbr.rel (0) target = $region9
    $region8: #{tpu_custom_call.1} parent=1 // pred_region
      %s24 = ssub.s32 2048, 2048
      %25 = vsyncadd [#allocation6], %s24
      %s26 = sshll.u32 [#allocation5], 4
      %s27 = int_to_ptr.vmem [resolvable:$true] %s26
      %32 = dma.hbm_to_vmem [thread:$0]  %s1, 2048, %s27, [#allocation6], 128, 128, 8
    $region9: #{tpu_custom_call.1} parent=1 // pred_fallthru
      _
    // Predicated region
    $region10: #{tpu_custom_call.1} parent=1 // pred_check
      _
    $region11: #{tpu_custom_call.1} parent=1 // pred_check_branch
      %34 = sbr.rel (0) target = $region13
    $region12: #{tpu_custom_call.1} parent=1 // pred_region
      _
    $region13: #{tpu_custom_call.1} parent=1 // pred_fallthru
      _
    // Predicated region
    $region14: #{tpu_custom_call.1} parent=1 // pred_check
      _
    $region15: #{tpu_custom_call.1} parent=1 // pred_check_branch
      %36 = sbr.rel (0) target = $region17
    $region16: #{tpu_custom_call.1} parent=1 // pred_region
      %37 = dma.done [#allocation3], 128
    $region17: #{tpu_custom_call.1} parent=1 // pred_fallthru
      _
    // Predicated region
    $region18: #{tpu_custom_call.1} parent=1 // pred_check
      _
    $region19: #{tpu_custom_call.1} parent=1 // pred_check_branch
      %39 = sbr.rel (0) target = $region21
    $region20: #{tpu_custom_call.1} parent=1 // pred_region
      %40 = dma.done [#allocation6], 2048
    $region21: #{tpu_custom_call.1} parent=1 // pred_fallthru
      _
    %p41 = scmp.eq.s32.totalorder 0, 0
    // Predicated region
    $region22: #{tpu_custom_call.1} parent=1 // pred_check
      %p42 = pneg %p41
    $region23: #{tpu_custom_call.1} parent=1 // pred_check_branch
      %44 = sbr.rel (%p42) target = $region25
    $region24: #{tpu_custom_call.1} parent=1 // pred_region
      %45 = vst [vmem:[#allocation7] sm:$0xff] 0.0
    $region25: #{tpu_custom_call.1} parent=1 // pred_fallthru
      _
    %v46 = vld [vmem:[#allocation7] sm:$0xff]
    %v47 = vld [vmem:[#allocation2] sm:$0xff]
    %v48 = vld [vmem:[#allocation5] sm:$0xff]
    %v49 = vld [vmem:[#allocation5 + $0x8] sm:$0xff]
    %v50 = vld [vmem:[#allocation5 + $0x10] sm:$0xff]
    %v51 = vld [vmem:[#allocation5 + $0x18] sm:$0xff]
    %v52 = vld [vmem:[#allocation5 + $0x20] sm:$0xff]
    %v53 = vld [vmem:[#allocation5 + $0x28] sm:$0xff]
    %v54 = vld [vmem:[#allocation5 + $0x30] sm:$0xff]
    %v55 = vld [vmem:[#allocation5 + $0x38] sm:$0xff]
    %v56 = vld [vmem:[#allocation5 + $0x40] sm:$0xff]
    %v57 = vld [vmem:[#allocation5 + $0x48] sm:$0xff]
    %v58 = vld [vmem:[#allocation5 + $0x50] sm:$0xff]
    %v59 = vld [vmem:[#allocation5 + $0x58] sm:$0xff]
    %v60 = vld [vmem:[#allocation5 + $0x60] sm:$0xff]
    %v61 = vld [vmem:[#allocation5 + $0x68] sm:$0xff]
    %v62 = vld [vmem:[#allocation5 + $0x70] sm:$0xff]
    %v63 = vld [vmem:[#allocation5 + $0x78] sm:$0xff]
    %64 = vmatprep.subr.mxu0 0.0
    %65 = vmatpush1.msra.mxu0 %v48
    %66 = vmatprep.subr.mxu0 0.0
    %67 = vmatpush1.msra.mxu0 %v49
    %68 = vmatprep.subr.mxu0 0.0
    %69 = vmatpush1.msra.mxu0 %v50
    %70 = vmatprep.subr.mxu0 0.0
    %71 = vmatpush1.msra.mxu0 %v51
    %72 = vmatprep.subr.mxu0 0.0
    %73 = vmatpush1.msra.mxu0 %v52
    %74 = vmatprep.subr.mxu0 0.0
    %75 = vmatpush1.msra.mxu0 %v53
    %76 = vmatprep.subr.mxu0 0.0
    %77 = vmatpush1.msra.mxu0 %v54
    %78 = vmatprep.subr.mxu0 0.0
    %79 = vmatpush1.msra.mxu0 %v55
    %80 = vmatprep.subr.mxu0 0.0
    %81 = vmatpush1.msra.mxu0 %v56
    %82 = vmatprep.subr.mxu0 0.0
    %83 = vmatpush1.msra.mxu0 %v57
    %84 = vmatprep.subr.mxu0 0.0
    %85 = vmatpush1.msra.mxu0 %v58
    %86 = vmatprep.subr.mxu0 0.0
    %87 = vmatpush1.msra.mxu0 %v59
    %88 = vmatprep.subr.mxu0 0.0
    %89 = vmatpush1.msra.mxu0 %v60
    %90 = vmatprep.subr.mxu0 0.0
    %91 = vmatpush1.msra.mxu0 %v61
    %92 = vmatprep.subr.mxu0 0.0
    %93 = vmatpush1.msra.mxu0 %v62
    %94 = vmatprep.subr.mxu0 0.0
    %95 = vmatpush1.msra.mxu0 %v63
    %96 = vmatprep.subr.mxu0 0.0
    %97 = vmatpush1.msra.mxu0 0.0
    %98 = vmatprep.subr.mxu0 0.0
    %99 = vmatpush1.msra.mxu0 0.0
    %100 = vmatprep.subr.mxu0 0.0
    %101 = vmatpush1.msra.mxu0 0.0
    %102 = vmatprep.subr.mxu0 0.0
    %103 = vmatpush1.msra.mxu0 0.0
    %104 = vmatprep.subr.mxu0 0.0
    %105 = vmatpush1.msra.mxu0 0.0
    %106 = vmatprep.subr.mxu0 0.0
    %107 = vmatpush1.msra.mxu0 0.0
    %108 = vmatprep.subr.mxu0 0.0
    %109 = vmatpush1.msra.mxu0 0.0
    %110 = vmatprep.subr.mxu0 0.0
    %111 = vmatpush1.msra.mxu0 0.0
    %112 = vmatprep.subr.mxu0 0.0
    %113 = vmatpush1.msra.mxu0 0.0
    %114 = vmatprep.subr.mxu0 0.0
    %115 = vmatpush1.msra.mxu0 0.0
    %116 = vmatprep.subr.mxu0 0.0
    %117 = vmatpush1.msra.mxu0 0.0
    %118 = vmatprep.subr.mxu0 0.0
    %119 = vmatpush1.msra.mxu0 0.0
    %120 = vmatprep.subr.mxu0 0.0
    %121 = vmatpush1.msra.mxu0 0.0
    %122 = vmatprep.subr.mxu0 0.0
    %123 = vmatpush1.msra.mxu0 0.0
    %124 = vmatprep.subr.mxu0 0.0
    %125 = vmatpush1.msra.mxu0 0.0
    %126 = vmatprep.subr.mxu0 0.0
    %127 = vmatpush1.msra.mxu0 0.0
    %128 = vmatprep.mubr.f32.mxu0 0.0
    %129 = vmatmul.mubr.f32.gmra.mrb[0].mxu0 %v47
    %v130 = vpop.f32.mrb[0].mxu0
    %v131 = vadd.f32 0.0, %v130
    %v132 = vpop.f32.mrb[0].mxu0
    %133 = vdwg.mxu0
    %v134 = vadd.f32 %v46, %v131
    %135 = vst [vmem:[#allocation7] sm:$0xff] %v134
    // Predicated region
    $region26: #{tpu_custom_call.1} parent=1 // pred_check
      %p136 = pneg %p41
    $region27: #{tpu_custom_call.1} parent=1 // pred_check_branch
      %138 = sbr.rel (%p136) target = $region29
    $region28: #{tpu_custom_call.1} parent=1 // pred_region
      %v139 = vld [vmem:[#allocation7] sm:$0xff]
      %v140 = vld [vmem:[%s2] sm:$0x1]
      %v142 = vlaneseq
      %v143 = vshrl.u32 %v142, 7
      %v144 = vsub.s32 0, %v143
      %v145 = vrot.slane %v140, %v144
      %v147 = vadd.f32 %v139, %v145
      %148 = vst [vmem:[#allocation7] sm:$0xff] %v147
    $region29: #{tpu_custom_call.1} parent=1 // pred_fallthru
      _
    // Predicated region
    $region30: #{tpu_custom_call.1} parent=1 // pred_check
      _
    $region31: #{tpu_custom_call.1} parent=1 // pred_check_branch
      %150 = sbr.rel (0) target = $region33
    $region32: #{tpu_custom_call.1} parent=1 // pred_region
      %s152 = ssub.s32 128, 128
      %153 = vsyncadd [#allocation4], %s152
      %s155 = sshll.u32 [#allocation7], 4
      %s156 = int_to_ptr.vmem [resolvable:$true] %s155
      %158 = dma.vmem_to_hbm [thread:$0]  %s156, 128, %s3, [#allocation4]
    $region33: #{tpu_custom_call.1} parent=1 // pred_fallthru
      _
    // Predicated region
    $region34: #{tpu_custom_call.1} parent=1 // pred_check
      _
    $region35: #{tpu_custom_call.1} parent=1 // pred_check_branch
      %160 = sbr.rel (0) target = $region37
    $region36: #{tpu_custom_call.1} parent=1 // pred_region
      %161 = dma.done [#allocation4], 128
    $region37: #{tpu_custom_call.1} parent=1 // pred_fallthru
      _
    %162 = vsyncpa [#allocation3], 1
    %163 = vsyncpa [#allocation6], 1
    %164 = vsyncpa [#allocation4], 1

</llo_original>
